<compile_context>
chip_gen: v7x
topology: tpu7x:2x2x1
jax: 0.10.0
libtpu: 0.0.40
codegen_flags: <defaults>
</compile_context>

<pallas_src>
import functools

import jax
import jax.numpy as jnp
from jax.experimental import pallas as pl
from jax.experimental.pallas import tpu as pltpu

# Module sizes (D_in / H / D_out of the PyTorch module).
D_IN = 32
H = 64
D_OUT = 16

PACK = 8                     # batch rows packed per 128-lane register row
PACK_IN = PACK * D_IN        # 256  packed x lane width
PACK_H = PACK * H            # 512  packed hidden lane width
PACK_OUT = PACK * D_OUT      # 128  packed logits lane width (lane-dense output)


def _round_up(x, m):
    return ((x + m - 1) // m) * m


def _cores_per_chip():
    """Best-effort TensorCore count per chip (v7x has 2; v5e/v6e have 1)."""
    try:
        kind = getattr(jax.devices()[0], "device_kind", "").lower()
        if "v7" in kind or "7x" in kind:
            return 2
    except Exception:
        pass
    return 1


def _pick_tile(m_rows, tile_cap, cores):
    """Packed-row tile.  Single full-extent block when possible (v5e/v6e);
    split into >=`cores` steps only when there are 2 TCs and enough rows."""
    if m_rows <= 8:
        return m_rows                                  # full-extent block
    padded = _round_up(m_rows, 8)
    steps = pl.cdiv(padded, tile_cap)
    if cores > 1 and padded >= 64:                     # worth feeding both TCs
        steps = max(steps, cores)
    if steps <= 1:
        return m_rows                                  # full-extent block
    tile = _round_up(pl.cdiv(padded, steps), 8)        # multi-step: multiple of 8
    return min(tile, (m_rows // 8) * 8)


def _mlp_softmax_kernel(xp_ref, w1p_ref, b1p_ref, w2p_ref, b2p_ref, seg_ref, o_ref):
    xp = xp_ref[...]                                                   # (tile, 256)

    # Layer 1 (packed, block-diagonal weights) + bias + ReLU.
    h = jnp.dot(xp, w1p_ref[...], preferred_element_type=jnp.float32) + b1p_ref[...]
    h = jnp.maximum(h, 0.0)                                            # (tile, 512)

    # Layer 2 (+ the folded useless-bias contribution baked into b2p).
    logits = jnp.dot(h, w2p_ref[...], preferred_element_type=jnp.float32) + b2p_ref[...]

    # Softmax over every 16-lane segment.  Subtracting the whole-row max is
    # exact (softmax shift invariance; the shift is constant inside each
    # segment) and avoids a segmented max.
    m = jnp.max(logits, axis=-1, keepdims=True)
    e = jnp.exp(logits - m)                                            # (tile, 128)

    # Per-segment sums broadcast to all 16 lanes of the segment via a
    # block-diagonal ones matrix (one extra lane-dense MXU pass).
    denom = jnp.dot(e, seg_ref[...], preferred_element_type=jnp.float32)

    # EUP approx reciprocal + one Newton step (~1e-7 rel err, inside 1e-5 tol).
    inv = pl.reciprocal(denom, approx=True)
    inv = inv * (2.0 - denom * inv)

    o_ref[...] = (e * inv).astype(o_ref.dtype)                         # lane-dense store


def prepare_params(w1, b1, useless_bias, w2, b2):
    """One-time parameter prep (hoisted out of the per-call forward path).

    w1: (D_in, H), b1: (1, H), useless_bias: (1, H), w2: (H, D_out), b2: (1, D_out).
    """
    w1 = w1.astype(jnp.float32)
    w2 = w2.astype(jnp.float32)
    # Fold the constant ones(1,H) bias:  (relu(.)+ub)@W2 + b2 == relu(.)@W2 + (b2 + ub@W2)
    b2_eff = (b2 + useless_bias @ w2).astype(jnp.float32)              # (1, D_out)

    eye = jnp.eye(PACK, dtype=jnp.float32)
    w1p = jnp.kron(eye, w1)                                            # (256, 512)
    w2p = jnp.kron(eye, w2)                                            # (512, 128)
    b1p = jnp.tile(b1.astype(jnp.float32), (1, PACK))                  # (1, 512)
    b2p = jnp.tile(b2_eff, (1, PACK))                                  # (1, 128)
    seg = jnp.kron(eye, jnp.ones((D_OUT, D_OUT), jnp.float32))         # (128, 128)
    return (w1p, b1p, w2p, b2p, seg)


@functools.partial(jax.jit, static_argnames=("tile_rows",))
def mymodule2_forward(x, prepared, *, tile_rows=1024):
    """x: (B, D_in) f32 -> (B, D_out) softmax probs, matching MyModule2.forward."""
    w1p, b1p, w2p, b2p, seg = prepared
    batch, d_in = x.shape
    assert d_in == D_IN

    # Pack PACK batch rows per 128-lane row (bit-identical reshape; pad at most
    # PACK-1 zero rows so the reshape is legal — fused under jit, negligible).
    bp = _round_up(batch, PACK)
    if bp != batch:
        x = jnp.pad(x, ((0, bp - batch), (0, 0)))
    m_rows = bp // PACK
    xp = x.reshape(m_rows, PACK_IN)                                    # (M, 256)

    tile = _pick_tile(m_rows, int(tile_rows), _cores_per_chip())
    grid_b = pl.cdiv(m_rows, tile)

    cost = pl.CostEstimate(
        flops=2 * m_rows * (PACK_IN * PACK_H + PACK_H * PACK_OUT + PACK_OUT * PACK_OUT),
        transcendentals=m_rows * PACK_OUT,
        bytes_accessed=4 * (xp.size + w1p.size + b1p.size + w2p.size + b2p.size
                            + seg.size + m_rows * PACK_OUT),
    )

    out_p = pl.pallas_call(
        _mlp_softmax_kernel,
        out_shape=jax.ShapeDtypeStruct((m_rows, PACK_OUT), jnp.float32),
        grid_spec=pltpu.PrefetchScalarGridSpec(
            num_scalar_prefetch=0,
            grid=(grid_b,),
            in_specs=[
                pl.BlockSpec((tile, PACK_IN), lambda i: (i, 0)),        # streamed rows
                pl.BlockSpec((PACK_IN, PACK_H), lambda i: (0, 0)),      # resident W1p
                pl.BlockSpec((1, PACK_H), lambda i: (0, 0)),            # resident b1p
                pl.BlockSpec((PACK_H, PACK_OUT), lambda i: (0, 0)),     # resident W2p
                pl.BlockSpec((1, PACK_OUT), lambda i: (0, 0)),          # resident b2p
                pl.BlockSpec((PACK_OUT, PACK_OUT), lambda i: (0, 0)),   # resident seg-sum
            ],
            out_specs=pl.BlockSpec((tile, PACK_OUT), lambda i: (i, 0)),
        ),
        compiler_params=pltpu.CompilerParams(
            dimension_semantics=("parallel",),      # 2-way batch split on v7x only
        ),
        cost_estimate=cost,
    )(xp, w1p, b1p, w2p, b2p, seg)

    out = out_p.reshape(bp, D_OUT)                                      # free reshape
    return out[:batch] if bp != batch else out


def init_params(key):
    """Deterministic parameter init matching nn.Linear shapes (stored transposed)."""
    k1, k2, k3, k4 = jax.random.split(key, 4)
    lim1 = 1.0 / jnp.sqrt(D_IN)
    w1 = jax.random.uniform(k1, (D_IN, H), jnp.float32, -lim1, lim1)
    b1 = jax.random.uniform(k2, (1, H), jnp.float32, -lim1, lim1)
    lim2 = 1.0 / jnp.sqrt(H)
    w2 = jax.random.uniform(k3, (H, D_OUT), jnp.float32, -lim2, lim2)
    b2 = jax.random.uniform(k4, (1, D_OUT), jnp.float32, -lim2, lim2)
    useless_bias = jnp.ones((1, H), jnp.float32)                        # my_useless_bias
    return w1, b1, useless_bias, w2, b2


def reference_forward(x, w1, b1, useless_bias, w2, b2):
    h = jnp.maximum(x @ w1 + b1, 0.0) + useless_bias
    logits = h @ w2 + b2
    return jax.nn.softmax(logits, axis=-1)


if __name__ == "__main__":
    key = jax.random.PRNGKey(0)
    kx, kp, kx2 = jax.random.split(key, 3)
    raw = init_params(kp)
    prepared = prepare_params(*raw)        # one-time prep, hoisted out of forward

    # Small shape consistent with the module.
    x = jax.random.normal(kx, (8, D_IN), jnp.float32)
    out = jax.block_until_ready(mymodule2_forward(x, prepared))
    ref = reference_forward(x, *raw)
    assert out.shape == (8, D_OUT)
    assert jnp.allclose(out, ref, atol=1e-5, rtol=1e-5), "mismatch vs reference (B=8)"

    # Batch not a multiple of 8 (exercises the pack-pad + partial-block path).
    xb = jax.random.normal(kx2, (300, D_IN), jnp.float32)
    outb = jax.block_until_ready(mymodule2_forward(xb, prepared))
    refb = reference_forward(xb, *raw)
    assert outb.shape == (300, D_OUT)
    assert jnp.allclose(outb, refb, atol=1e-5, rtol=1e-5), "mismatch vs reference (B=300)"

    print("KERNEL_OK")
</pallas_src>

<mosaic_0001>
module attributes {stable_mosaic.version = 11 : i64} {
  func.func @_mlp_softmax_kernel(%arg0: i32, %arg1: memref<1x256xf32, #tpu.memory_space<vmem>>, %arg2: memref<256x512xf32, #tpu.memory_space<vmem>>, %arg3: memref<1x512xf32, #tpu.memory_space<vmem>>, %arg4: memref<512x128xf32, #tpu.memory_space<vmem>>, %arg5: memref<1x128xf32, #tpu.memory_space<vmem>>, %arg6: memref<128x128xf32, #tpu.memory_space<vmem>>, %arg7: memref<1x128xf32, #tpu.memory_space<vmem>>) attributes {dimension_semantics = [#tpu.dimension_semantics<parallel>], iteration_bounds = array<i64: 1>, scalar_prefetch = 0 : i64, scratch_operands = 0 : i64, tpu.core_type = #tpu.core_type<tc>, window_params = [{transform_indices = @transform_0, window_bounds = array<i64: 1, 256>}, {pipeline_mode = #tpu.pipeline_mode<synchronous>, transform_indices = @transform_1, window_bounds = array<i64: 256, 512>}, {pipeline_mode = #tpu.pipeline_mode<synchronous>, transform_indices = @transform_2, window_bounds = array<i64: 1, 512>}, {pipeline_mode = #tpu.pipeline_mode<synchronous>, transform_indices = @transform_3, window_bounds = array<i64: 512, 128>}, {pipeline_mode = #tpu.pipeline_mode<synchronous>, transform_indices = @transform_4, window_bounds = array<i64: 1, 128>}, {pipeline_mode = #tpu.pipeline_mode<synchronous>, transform_indices = @transform_5, window_bounds = array<i64: 128, 128>}, {transform_indices = @transform_6, window_bounds = array<i64: 1, 128>}]} {
    %c0 = arith.constant 0 : index
    %c0_0 = arith.constant 0 : index
    %0 = vector.load %arg1[%c0, %c0_0] : memref<1x256xf32, #tpu.memory_space<vmem>>, vector<1x256xf32>
    %c0_1 = arith.constant 0 : index
    %c0_2 = arith.constant 0 : index
    %1 = vector.load %arg2[%c0_1, %c0_2] : memref<256x512xf32, #tpu.memory_space<vmem>>, vector<256x512xf32>
    %cst = arith.constant dense<0.000000e+00> : vector<1x512xf32>
    %2 = tpu.matmul %0, %1, %cst {dimension_numbers = #tpu.dot_dimension_numbers<[1], [0], [0], [1], [0, 0, 1, 1], [], []>} : vector<1x256xf32>, vector<256x512xf32>, vector<1x512xf32> -> vector<1x512xf32>
    %c0_3 = arith.constant 0 : index
    %c0_4 = arith.constant 0 : index
    %3 = vector.load %arg3[%c0_3, %c0_4] : memref<1x512xf32, #tpu.memory_space<vmem>>, vector<1x512xf32>
    %4 = arith.addf %2, %3 : vector<1x512xf32>
    %cst_5 = arith.constant 0.000000e+00 : f32
    %5 = vector.broadcast %cst_5 : f32 to vector<1x512xf32>
    %6 = arith.maximumf %4, %5 : vector<1x512xf32>
    %c0_6 = arith.constant 0 : index
    %c0_7 = arith.constant 0 : index
    %7 = vector.load %arg4[%c0_6, %c0_7] : memref<512x128xf32, #tpu.memory_space<vmem>>, vector<512x128xf32>
    %cst_8 = arith.constant dense<0.000000e+00> : vector<1x128xf32>
    %8 = tpu.matmul %6, %7, %cst_8 {dimension_numbers = #tpu.dot_dimension_numbers<[1], [0], [0], [1], [0, 0, 1, 1], [], []>} : vector<1x512xf32>, vector<512x128xf32>, vector<1x128xf32> -> vector<1x128xf32>
    %c0_9 = arith.constant 0 : index
    %c0_10 = arith.constant 0 : index
    %9 = vector.load %arg5[%c0_9, %c0_10] : memref<1x128xf32, #tpu.memory_space<vmem>>, vector<1x128xf32>
    %10 = arith.addf %8, %9 : vector<1x128xf32>
    %cst_11 = arith.constant dense<0xFF800000> : vector<1xf32>
    %11 = vector.multi_reduction <maximumf>, %10, %cst_11 [1] : vector<1x128xf32> to vector<1xf32>
    %12 = vector.shape_cast %11 : vector<1xf32> to vector<1x1xf32>
    %13 = vector.broadcast %12 : vector<1x1xf32> to vector<1x128xf32>
    %14 = arith.subf %10, %13 : vector<1x128xf32>
    %15 = math.exp %14 : vector<1x128xf32>
    %c0_12 = arith.constant 0 : index
    %c0_13 = arith.constant 0 : index
    %16 = vector.load %arg6[%c0_12, %c0_13] : memref<128x128xf32, #tpu.memory_space<vmem>>, vector<128x128xf32>
    %cst_14 = arith.constant dense<0.000000e+00> : vector<1x128xf32>
    %17 = tpu.matmul %15, %16, %cst_14 {dimension_numbers = #tpu.dot_dimension_numbers<[1], [0], [0], [1], [0, 0, 1, 1], [], []>} : vector<1x128xf32>, vector<128x128xf32>, vector<1x128xf32> -> vector<1x128xf32>
    %18 = tpu.reciprocal %17 {approx = true} : vector<1x128xf32> -> vector<1x128xf32>
    %19 = arith.mulf %17, %18 : vector<1x128xf32>
    %cst_15 = arith.constant 2.000000e+00 : f32
    %20 = vector.broadcast %cst_15 : f32 to vector<1x128xf32>
    %21 = arith.subf %20, %19 : vector<1x128xf32>
    %22 = arith.mulf %18, %21 : vector<1x128xf32>
    %23 = arith.mulf %15, %22 : vector<1x128xf32>
    %c0_16 = arith.constant 0 : index
    %c0_17 = arith.constant 0 : index
    %24 = vector.load %arg7[%c0_16, %c0_17] : memref<1x128xf32, #tpu.memory_space<vmem>>, vector<1x128xf32>
    tpu.vector_store %arg7[%c0_16, %c0_17], %23 {strides = array<i32>} : memref<1x128xf32, #tpu.memory_space<vmem>>, vector<1x128xf32>,
    return
  }
  func.func @transform_0(%arg0: i32) -> (i32, i32) {
    %c0_i32 = arith.constant 0 : i32
    %c0_i32_0 = arith.constant 0 : i32
    return %arg0, %c0_i32 : i32, i32
  }
  func.func @transform_1(%arg0: i32) -> (i32, i32) {
    %c0_i32 = arith.constant 0 : i32
    %c0_i32_0 = arith.constant 0 : i32
    %c0_i32_1 = arith.constant 0 : i32
    return %c0_i32, %c0_i32_0 : i32, i32
  }
  func.func @transform_2(%arg0: i32) -> (i32, i32) {
    %c0_i32 = arith.constant 0 : i32
    %c0_i32_0 = arith.constant 0 : i32
    %c0_i32_1 = arith.constant 0 : i32
    return %c0_i32, %c0_i32_0 : i32, i32
  }
  func.func @transform_3(%arg0: i32) -> (i32, i32) {
    %c0_i32 = arith.constant 0 : i32
    %c0_i32_0 = arith.constant 0 : i32
    %c0_i32_1 = arith.constant 0 : i32
    return %c0_i32, %c0_i32_0 : i32, i32
  }
  func.func @transform_4(%arg0: i32) -> (i32, i32) {
    %c0_i32 = arith.constant 0 : i32
    %c0_i32_0 = arith.constant 0 : i32
    %c0_i32_1 = arith.constant 0 : i32
    return %c0_i32, %c0_i32_0 : i32, i32
  }
  func.func @transform_5(%arg0: i32) -> (i32, i32) {
    %c0_i32 = arith.constant 0 : i32
    %c0_i32_0 = arith.constant 0 : i32
    %c0_i32_1 = arith.constant 0 : i32
    return %c0_i32, %c0_i32_0 : i32, i32
  }
  func.func @transform_6(%arg0: i32) -> (i32, i32) {
    %c0_i32 = arith.constant 0 : i32
    %c0_i32_0 = arith.constant 0 : i32
    return %arg0, %c0_i32 : i32, i32
  }
}

</mosaic_0001>

<llo_original>
// kernel: mymodule2_forward.1
$region0: #{mymodule2_forward.1}
  #allocation0 [shape = 'u32[]', space=smem, size = 0x4, offset = 0x4, fixed_abs, tag = 'smem constant byte address 0x4 - core index']
  #allocation1 [shape = 'u32[144,128]{1,0:T(1,128)}', space=vmem, size = 0x12000, scoped, tag = 'internal scratch']
  %s0 = inlined_call_operand.vmem [shape: f32[1,256], index: 0, kind: input, shape index: {}]
  %s1 = inlined_call_operand.hbm [shape: f32[256,512], index: 1, kind: input, shape index: {}]
  %s2 = inlined_call_operand.vmem [shape: f32[1,512], index: 2, kind: input, shape index: {}]
  %s3 = inlined_call_operand.hbm [shape: f32[512,128], index: 3, kind: input, shape index: {}]
  %s4 = inlined_call_operand.vmem [shape: f32[1,128], index: 4, kind: input, shape index: {}]
  %s5 = inlined_call_operand.hbm [shape: f32[128,128], index: 5, kind: input, shape index: {}]
  %s6 = inlined_call_operand.vmem [shape: f32[1,128], index: 6, kind: output, shape index: {}]
  %s7 = sld [smem:[#allocation0]]
  $region46: #{mymodule2_forward.1} parent=0
    _
  %s9 = ssub.s32 1, %s7
  %s10 = scalar_select 0, %s9, %s7
  $region1: #{mymodule2_forward.1} parent=0
    #allocation2 [shape = 'u8[524288]{0}', space=vmem, size = 0x80000, scoped, tag = 'input window, operand 1, single buffered']
    #allocation3 [shape = 's32[1]{0}', space=sflag, size = 0x4, scoped, tag = 'scoped memory for mymodule2_forward.1']
    #allocation4 [shape = 'u8[262144]{0}', space=vmem, size = 0x40000, scoped, tag = 'input window, operand 3, single buffered']
    #allocation5 [shape = 's32[1]{0}', space=sflag, size = 0x4, scoped, tag = 'scoped memory for mymodule2_forward.1']
    #allocation6 [shape = 'u8[65536]{0}', space=vmem, size = 0x10000, scoped, tag = 'input window, operand 5, single buffered']
    %11 = vsyncpa [#allocation3], 0
    %12 = vsyncpa [#allocation5], 0
    // Predicated region
    $region2: #{mymodule2_forward.1} parent=1 // pred_check
      _
    $region3: #{mymodule2_forward.1} parent=1 // pred_check_branch
      %14 = sbr.rel (0) target = $region5
    $region4: #{mymodule2_forward.1} parent=1 // pred_region
      _
    $region5: #{mymodule2_forward.1} parent=1 // pred_fallthru
      _
    // Predicated region
    $region6: #{mymodule2_forward.1} parent=1 // pred_check
      _
    $region7: #{mymodule2_forward.1} parent=1 // pred_check_branch
      %16 = sbr.rel (0) target = $region9
    $region8: #{mymodule2_forward.1} parent=1 // pred_region
      %s18 = ssub.s32 16384, 16384
      %19 = vsyncadd [#allocation3], %s18
      %s20 = sshll.u32 [#allocation2], 4
      %s21 = int_to_ptr.vmem [resolvable:$true] %s20
      %26 = dma.hbm_to_vmem [thread:$0]  %s1, 16384, %s21, [#allocation3], 512, 512, 32
    $region9: #{mymodule2_forward.1} parent=1 // pred_fallthru
      _
    // Predicated region
    $region10: #{mymodule2_forward.1} parent=1 // pred_check
      _
    $region11: #{mymodule2_forward.1} parent=1 // pred_check_branch
      %28 = sbr.rel (0) target = $region13
    $region12: #{mymodule2_forward.1} parent=1 // pred_region
      _
    $region13: #{mymodule2_forward.1} parent=1 // pred_fallthru
      _
    // Predicated region
    $region14: #{mymodule2_forward.1} parent=1 // pred_check
      _
    $region15: #{mymodule2_forward.1} parent=1 // pred_check_branch
      %30 = sbr.rel (0) target = $region17
    $region16: #{mymodule2_forward.1} parent=1 // pred_region
      %s32 = ssub.s32 8192, 8192
      %33 = vsyncadd [#allocation5], %s32
      %s34 = sshll.u32 [#allocation4], 4
      %s35 = int_to_ptr.vmem [resolvable:$true] %s34
      %40 = dma.hbm_to_vmem [thread:$0]  %s3, 8192, %s35, [#allocation5], 128, 128, 8
    $region17: #{mymodule2_forward.1} parent=1 // pred_fallthru
      _
    // Predicated region
    $region18: #{mymodule2_forward.1} parent=1 // pred_check
      _
    $region19: #{mymodule2_forward.1} parent=1 // pred_check_branch
      %42 = sbr.rel (0) target = $region21
    $region20: #{mymodule2_forward.1} parent=1 // pred_region
      _
    $region21: #{mymodule2_forward.1} parent=1 // pred_fallthru
      _
    // Predicated region
    $region22: #{mymodule2_forward.1} parent=1 // pred_check
      _
    $region23: #{mymodule2_forward.1} parent=1 // pred_check_branch
      %44 = sbr.rel (0) target = $region25
    $region24: #{mymodule2_forward.1} parent=1 // pred_region
      %s46 = ssub.s32 2048, 2048
      %47 = vsyncadd [#allocation5], %s46
      %s48 = sshll.u32 [#allocation6], 4
      %s49 = int_to_ptr.vmem [resolvable:$true] %s48
      %54 = dma.hbm_to_vmem [thread:$0]  %s5, 2048, %s49, [#allocation5], 128, 128, 8
    $region25: #{mymodule2_forward.1} parent=1 // pred_fallthru
      _
    // Predicated region
    $region26: #{mymodule2_forward.1} parent=1 // pred_check
      _
    $region27: #{mymodule2_forward.1} parent=1 // pred_check_branch
      %56 = sbr.rel (0) target = $region29
    $region28: #{mymodule2_forward.1} parent=1 // pred_region
      %57 = dma.done [#allocation3], 16384
    $region29: #{mymodule2_forward.1} parent=1 // pred_fallthru
      _
    // Predicated region
    $region30: #{mymodule2_forward.1} parent=1 // pred_check
      _
    $region31: #{mymodule2_forward.1} parent=1 // pred_check_branch
      %59 = sbr.rel (0) target = $region33
    $region32: #{mymodule2_forward.1} parent=1 // pred_region
      %60 = dma.done [#allocation5], 8192
    $region33: #{mymodule2_forward.1} parent=1 // pred_fallthru
      _
    // Predicated region
    $region34: #{mymodule2_forward.1} parent=1 // pred_check
      _
    $region35: #{mymodule2_forward.1} parent=1 // pred_check_branch
      %62 = sbr.rel (0) target = $region37
    $region36: #{mymodule2_forward.1} parent=1 // pred_region
      %63 = dma.done [#allocation5], 2048
    $region37: #{mymodule2_forward.1} parent=1 // pred_fallthru
      _
    %v64 = vld [vmem:[%s0] sm:$0x3]
    %v65 = vld [vmem:[#allocation2] sm:$0xff]
    %v66 = vld [vmem:[#allocation2 + $0x8] sm:$0xff]
    %v67 = vld [vmem:[#allocation2 + $0x10] sm:$0xff]
    %v68 = vld [vmem:[#allocation2 + $0x18] sm:$0xff]
    %v69 = vld [vmem:[#allocation2 + $0x20] sm:$0xff]
    %v70 = vld [vmem:[#allocation2 + $0x28] sm:$0xff]
    %v71 = vld [vmem:[#allocation2 + $0x30] sm:$0xff]
    %v72 = vld [vmem:[#allocation2 + $0x38] sm:$0xff]
    %v73 = vld [vmem:[#allocation2 + $0x40] sm:$0xff]
    %v74 = vld [vmem:[#allocation2 + $0x48] sm:$0xff]
    %v75 = vld [vmem:[#allocation2 + $0x50] sm:$0xff]
    %v76 = vld [vmem:[#allocation2 + $0x58] sm:$0xff]
    %v77 = vld [vmem:[#allocation2 + $0x60] sm:$0xff]
    %v78 = vld [vmem:[#allocation2 + $0x68] sm:$0xff]
    %v79 = vld [vmem:[#allocation2 + $0x70] sm:$0xff]
    %v80 = vld [vmem:[#allocation2 + $0x78] sm:$0xff]
    %v81 = vld [vmem:[#allocation2 + $0x80] sm:$0xff]
    %v82 = vld [vmem:[#allocation2 + $0x88] sm:$0xff]
    %v83 = vld [vmem:[#allocation2 + $0x90] sm:$0xff]
    %v84 = vld [vmem:[#allocation2 + $0x98] sm:$0xff]
    %v85 = vld [vmem:[#allocation2 + $0xa0] sm:$0xff]
    %v86 = vld [vmem:[#allocation2 + $0xa8] sm:$0xff]
    %v87 = vld [vmem:[#allocation2 + $0xb0] sm:$0xff]
    %v88 = vld [vmem:[#allocation2 + $0xb8] sm:$0xff]
    %v89 = vld [vmem:[#allocation2 + $0xc0] sm:$0xff]
    %v90 = vld [vmem:[#allocation2 + $0xc8] sm:$0xff]
    %v91 = vld [vmem:[#allocation2 + $0xd0] sm:$0xff]
    %v92 = vld [vmem:[#allocation2 + $0xd8] sm:$0xff]
    %v93 = vld [vmem:[#allocation2 + $0xe0] sm:$0xff]
    %v94 = vld [vmem:[#allocation2 + $0xe8] sm:$0xff]
    %v95 = vld [vmem:[#allocation2 + $0xf0] sm:$0xff]
    %v96 = vld [vmem:[#allocation2 + $0xf8] sm:$0xff]
    %v97 = vld [vmem:[#allocation2 + $0x100] sm:$0xff]
    %v98 = vld [vmem:[#allocation2 + $0x108] sm:$0xff]
    %v99 = vld [vmem:[#allocation2 + $0x110] sm:$0xff]
    %v100 = vld [vmem:[#allocation2 + $0x118] sm:$0xff]
    %v101 = vld [vmem:[#allocation2 + $0x120] sm:$0xff]
    %v102 = vld [vmem:[#allocation2 + $0x128] sm:$0xff]
    %v103 = vld [vmem:[#allocation2 + $0x130] sm:$0xff]
    %v104 = vld [vmem:[#allocation2 + $0x138] sm:$0xff]
    %v105 = vld [vmem:[#allocation2 + $0x140] sm:$0xff]
    %v106 = vld [vmem:[#allocation2 + $0x148] sm:$0xff]
    %v107 = vld [vmem:[#allocation2 + $0x150] sm:$0xff]
    %v108 = vld [vmem:[#allocation2 + $0x158] sm:$0xff]
    %v109 = vld [vmem:[#allocation2 + $0x160] sm:$0xff]
    %v110 = vld [vmem:[#allocation2 + $0x168] sm:$0xff]
    %v111 = vld [vmem:[#allocation2 + $0x170] sm:$0xff]
    %v112 = vld [vmem:[#allocation2 + $0x178] sm:$0xff]
    %v113 = vld [vmem:[#allocation2 + $0x180] sm:$0xff]
    %v114 = vld [vmem:[#allocation2 + $0x188] sm:$0xff]
    %v115 = vld [vmem:[#allocation2 + $0x190] sm:$0xff]
    %v116 = vld [vmem:[#allocation2 + $0x198] sm:$0xff]
    %v117 = vld [vmem:[#allocation2 + $0x1a0] sm:$0xff]
    %v118 = vld [vmem:[#allocation2 + $0x1a8] sm:$0xff]
    %v119 = vld [vmem:[#allocation2 + $0x1b0] sm:$0xff]
    %v120 = vld [vmem:[#allocation2 + $0x1b8] sm:$0xff]
    %v121 = vld [vmem:[#allocation2 + $0x1c0] sm:$0xff]
    %v122 = vld [vmem:[#allocation2 + $0x1c8] sm:$0xff]
    %v123 = vld [vmem:[#allocation2 + $0x1d0] sm:$0xff]
    %v124 = vld [vmem:[#allocation2 + $0x1d8] sm:$0xff]
    %v125 = vld [vmem:[#allocation2 + $0x1e0] sm:$0xff]
    %v126 = vld [vmem:[#allocation2 + $0x1e8] sm:$0xff]
    %v127 = vld [vmem:[#allocation2 + $0x1f0] sm:$0xff]
    %v128 = vld [vmem:[#allocation2 + $0x1f8] sm:$0xff]
    %v129 = vld [vmem:[#allocation2 + $0x200] sm:$0xff]
    %v130 = vld [vmem:[#allocation2 + $0x208] sm:$0xff]
    %v131 = vld [vmem:[#allocation2 + $0x210] sm:$0xff]
    %v132 = vld [vmem:[#allocation2 + $0x218] sm:$0xff]
    %v133 = vld [vmem:[#allocation2 + $0x220] sm:$0xff]
    %v134 = vld [vmem:[#allocation2 + $0x228] sm:$0xff]
    %v135 = vld [vmem:[#allocation2 + $0x230] sm:$0xff]
    %v136 = vld [vmem:[#allocation2 + $0x238] sm:$0xff]
    %v137 = vld [vmem:[#allocation2 + $0x240] sm:$0xff]
    %v138 = vld [vmem:[#allocation2 + $0x248] sm:$0xff]
    %v139 = vld [vmem:[#allocation2 + $0x250] sm:$0xff]
    %v140 = vld [vmem:[#allocation2 + $0x258] sm:$0xff]
    %v141 = vld [vmem:[#allocation2 + $0x260] sm:$0xff]
    %v142 = vld [vmem:[#allocation2 + $0x268] sm:$0xff]
    %v143 = vld [vmem:[#allocation2 + $0x270] sm:$0xff]
    %v144 = vld [vmem:[#allocation2 + $0x278] sm:$0xff]
    %v145 = vld [vmem:[#allocation2 + $0x280] sm:$0xff]
    %v146 = vld [vmem:[#allocation2 + $0x288] sm:$0xff]
    %v147 = vld [vmem:[#allocation2 + $0x290] sm:$0xff]
    %v148 = vld [vmem:[#allocation2 + $0x298] sm:$0xff]
    %v149 = vld [vmem:[#allocation2 + $0x2a0] sm:$0xff]
    %v150 = vld [vmem:[#allocation2 + $0x2a8] sm:$0xff]
    %v151 = vld [vmem:[#allocation2 + $0x2b0] sm:$0xff]
    %v152 = vld [vmem:[#allocation2 + $0x2b8] sm:$0xff]
    %v153 = vld [vmem:[#allocation2 + $0x2c0] sm:$0xff]
    %v154 = vld [vmem:[#allocation2 + $0x2c8] sm:$0xff]
    %v155 = vld [vmem:[#allocation2 + $0x2d0] sm:$0xff]
    %v156 = vld [vmem:[#allocation2 + $0x2d8] sm:$0xff]
    %v157 = vld [vmem:[#allocation2 + $0x2e0] sm:$0xff]
    %v158 = vld [vmem:[#allocation2 + $0x2e8] sm:$0xff]
    %v159 = vld [vmem:[#allocation2 + $0x2f0] sm:$0xff]
    %v160 = vld [vmem:[#allocation2 + $0x2f8] sm:$0xff]
    %v161 = vld [vmem:[#allocation2 + $0x300] sm:$0xff]
    %v162 = vld [vmem:[#allocation2 + $0x308] sm:$0xff]
    %v163 = vld [vmem:[#allocation2 + $0x310] sm:$0xff]
    %v164 = vld [vmem:[#allocation2 + $0x318] sm:$0xff]
    %v165 = vld [vmem:[#allocation2 + $0x320] sm:$0xff]
    %v166 = vld [vmem:[#allocation2 + $0x328] sm:$0xff]
    %v167 = vld [vmem:[#allocation2 + $0x330] sm:$0xff]
    %v168 = vld [vmem:[#allocation2 + $0x338] sm:$0xff]
    %v169 = vld [vmem:[#allocation2 + $0x340] sm:$0xff]
    %v170 = vld [vmem:[#allocation2 + $0x348] sm:$0xff]
    %v171 = vld [vmem:[#allocation2 + $0x350] sm:$0xff]
    %v172 = vld [vmem:[#allocation2 + $0x358] sm:$0xff]
    %v173 = vld [vmem:[#allocation2 + $0x360] sm:$0xff]
    %v174 = vld [vmem:[#allocation2 + $0x368] sm:$0xff]
    %v175 = vld [vmem:[#allocation2 + $0x370] sm:$0xff]
    %v176 = vld [vmem:[#allocation2 + $0x378] sm:$0xff]
    %v177 = vld [vmem:[#allocation2 + $0x380] sm:$0xff]
    %v178 = vld [vmem:[#allocation2 + $0x388] sm:$0xff]
    %v179 = vld [vmem:[#allocation2 + $0x390] sm:$0xff]
    %v180 = vld [vmem:[#allocation2 + $0x398] sm:$0xff]
    %v181 = vld [vmem:[#allocation2 + $0x3a0] sm:$0xff]
    %v182 = vld [vmem:[#allocation2 + $0x3a8] sm:$0xff]
    %v183 = vld [vmem:[#allocation2 + $0x3b0] sm:$0xff]
    %v184 = vld [vmem:[#allocation2 + $0x3b8] sm:$0xff]
    %v185 = vld [vmem:[#allocation2 + $0x3c0] sm:$0xff]
    %v186 = vld [vmem:[#allocation2 + $0x3c8] sm:$0xff]
    %v187 = vld [vmem:[#allocation2 + $0x3d0] sm:$0xff]
    %v188 = vld [vmem:[#allocation2 + $0x3d8] sm:$0xff]
    %v189 = vld [vmem:[#allocation2 + $0x3e0] sm:$0xff]
    %v190 = vld [vmem:[#allocation2 + $0x3e8] sm:$0xff]
    %v191 = vld [vmem:[#allocation2 + $0x3f0] sm:$0xff]
    %v192 = vld [vmem:[#allocation2 + $0x3f8] sm:$0xff]
    %v193 = vld [vmem:[%s2] sm:$0xf]
    %v195 = vlaneseq
    %v196 = vshrl.u32 %v195, 7
    %v197 = vsub.s32 0, %v196
    %v198 = vrot.slane %v64, %v197
    %v199 = vlaneseq
    %v200 = vshrl.u32 %v199, 7
    %v201 = vsub.s32 1, %v200
    %v202 = vrot.slane %v64, %v201
    %v206 = vlaneseq
    %v207 = vshrl.u32 %v206, 7
    %v208 = vsub.s32 0, %v207
    %v209 = vrot.slane %v193, %v208
    %v210 = vlaneseq
    %v211 = vshrl.u32 %v210, 7
    %v212 = vsub.s32 1, %v211
    %v213 = vrot.slane %v193, %v212
    %v214 = vlaneseq
    %v215 = vshrl.u32 %v214, 7
    %v216 = vsub.s32 2, %v215
    %v217 = vrot.slane %v193, %v216
    %v218 = vlaneseq
    %v219 = vshrl.u32 %v218, 7
    %v220 = vsub.s32 3, %v219
    %v221 = vrot.slane %v193, %v220
    %226 = vmatprep.subr.mxu0 %v66
    %227 = vmatpush1.msra.mxu0 %v65
    %228 = vmatprep.subr.mxu0 %v70
    %229 = vmatpush1.msra.mxu0 %v69
    %230 = vmatprep.subr.mxu0 %v74
    %231 = vmatpush1.msra.mxu0 %v73
    %232 = vmatprep.subr.mxu0 %v78
    %233 = vmatpush1.msra.mxu0 %v77
    %234 = vmatprep.subr.mxu0 %v82
    %235 = vmatpush1.msra.mxu0 %v81
    %236 = vmatprep.subr.mxu0 %v86
    %237 = vmatpush1.msra.mxu0 %v85
    %238 = vmatprep.subr.mxu0 %v90
    %239 = vmatpush1.msra.mxu0 %v89
    %240 = vmatprep.subr.mxu0 %v94
    %241 = vmatpush1.msra.mxu0 %v93
    %242 = vmatprep.subr.mxu0 %v98
    %243 = vmatpush1.msra.mxu0 %v97
    %244 = vmatprep.subr.mxu0 %v102
    %245 = vmatpush1.msra.mxu0 %v101
    %246 = vmatprep.subr.mxu0 %v106
    %247 = vmatpush1.msra.mxu0 %v105
    %248 = vmatprep.subr.mxu0 %v110
    %249 = vmatpush1.msra.mxu0 %v109
    %250 = vmatprep.subr.mxu0 %v114
    %251 = vmatpush1.msra.mxu0 %v113
    %252 = vmatprep.subr.mxu0 %v118
    %253 = vmatpush1.msra.mxu0 %v117
    %254 = vmatprep.subr.mxu0 %v122
    %255 = vmatpush1.msra.mxu0 %v121
    %256 = vmatprep.subr.mxu0 %v126
    %257 = vmatpush1.msra.mxu0 %v125
    %258 = vmatprep.subr.mxu0 %v130
    %259 = vmatpush1.msra.mxu0 %v129
    %260 = vmatprep.subr.mxu0 %v134
    %261 = vmatpush1.msra.mxu0 %v133
    %262 = vmatprep.subr.mxu0 %v138
    %263 = vmatpush1.msra.mxu0 %v137
    %264 = vmatprep.subr.mxu0 %v142
    %265 = vmatpush1.msra.mxu0 %v141
    %266 = vmatprep.subr.mxu0 %v146
    %267 = vmatpush1.msra.mxu0 %v145
    %268 = vmatprep.subr.mxu0 %v150
    %269 = vmatpush1.msra.mxu0 %v149
    %270 = vmatprep.subr.mxu0 %v154
    %271 = vmatpush1.msra.mxu0 %v153
    %272 = vmatprep.subr.mxu0 %v158
    %273 = vmatpush1.msra.mxu0 %v157
    %274 = vmatprep.subr.mxu0 %v162
    %275 = vmatpush1.msra.mxu0 %v161
    %276 = vmatprep.subr.mxu0 %v166
    %277 = vmatpush1.msra.mxu0 %v165
    %278 = vmatprep.subr.mxu0 %v170
    %279 = vmatpush1.msra.mxu0 %v169
    %280 = vmatprep.subr.mxu0 %v174
    %281 = vmatpush1.msra.mxu0 %v173
    %282 = vmatprep.subr.mxu0 %v178
    %283 = vmatpush1.msra.mxu0 %v177
    %284 = vmatprep.subr.mxu0 %v182
    %285 = vmatpush1.msra.mxu0 %v181
    %286 = vmatprep.subr.mxu0 %v186
    %287 = vmatpush1.msra.mxu0 %v185
    %288 = vmatprep.subr.mxu0 %v190
    %289 = vmatpush1.msra.mxu0 %v189
    %290 = vmatprep.mubr.f32.mxu0 %v202
    %291 = vmatmul.mubr.f32.gmra.mrb[0].mxu0 %v198
    %v292 = vpop.f32.mrb[0].mxu0
    %v293 = vadd.f32 %v209, %v292
    %v294 = vpop.f32.mrb[0].mxu0
    %v295 = vadd.f32 %v213, %v294
    %296 = vdwg.mxu0
    %297 = vmatprep.subr.mxu0 %v68
    %298 = vmatpush1.msra.mxu0 %v67
    %299 = vmatprep.subr.mxu0 %v72
    %300 = vmatpush1.msra.mxu0 %v71
    %301 = vmatprep.subr.mxu0 %v76
    %302 = vmatpush1.msra.mxu0 %v75
    %303 = vmatprep.subr.mxu0 %v80
    %304 = vmatpush1.msra.mxu0 %v79
    %305 = vmatprep.subr.mxu0 %v84
    %306 = vmatpush1.msra.mxu0 %v83
    %307 = vmatprep.subr.mxu0 %v88
    %308 = vmatpush1.msra.mxu0 %v87
    %309 = vmatprep.subr.mxu0 %v92
    %310 = vmatpush1.msra.mxu0 %v91
    %311 = vmatprep.subr.mxu0 %v96
    %312 = vmatpush1.msra.mxu0 %v95
    %313 = vmatprep.subr.mxu0 %v100
    %314 = vmatpush1.msra.mxu0 %v99
    %315 = vmatprep.subr.mxu0 %v104
    %316 = vmatpush1.msra.mxu0 %v103
    %317 = vmatprep.subr.mxu0 %v108
    %318 = vmatpush1.msra.mxu0 %v107
    %319 = vmatprep.subr.mxu0 %v112
    %320 = vmatpush1.msra.mxu0 %v111
    %321 = vmatprep.subr.mxu0 %v116
    %322 = vmatpush1.msra.mxu0 %v115
    %323 = vmatprep.subr.mxu0 %v120
    %324 = vmatpush1.msra.mxu0 %v119
    %325 = vmatprep.subr.mxu0 %v124
    %326 = vmatpush1.msra.mxu0 %v123
    %327 = vmatprep.subr.mxu0 %v128
    %328 = vmatpush1.msra.mxu0 %v127
    %329 = vmatprep.subr.mxu0 %v132
    %330 = vmatpush1.msra.mxu0 %v131
    %331 = vmatprep.subr.mxu0 %v136
    %332 = vmatpush1.msra.mxu0 %v135
    %333 = vmatprep.subr.mxu0 %v140
    %334 = vmatpush1.msra.mxu0 %v139
    %335 = vmatprep.subr.mxu0 %v144
    %336 = vmatpush1.msra.mxu0 %v143
    %337 = vmatprep.subr.mxu0 %v148
    %338 = vmatpush1.msra.mxu0 %v147
    %339 = vmatprep.subr.mxu0 %v152
    %340 = vmatpush1.msra.mxu0 %v151
    %341 = vmatprep.subr.mxu0 %v156
    %342 = vmatpush1.msra.mxu0 %v155
    %343 = vmatprep.subr.mxu0 %v160
    %344 = vmatpush1.msra.mxu0 %v159
    %345 = vmatprep.subr.mxu0 %v164
    %346 = vmatpush1.msra.mxu0 %v163
    %347 = vmatprep.subr.mxu0 %v168
    %348 = vmatpush1.msra.mxu0 %v167
    %349 = vmatprep.subr.mxu0 %v172
    %350 = vmatpush1.msra.mxu0 %v171
    %351 = vmatprep.subr.mxu0 %v176
    %352 = vmatpush1.msra.mxu0 %v175
    %353 = vmatprep.subr.mxu0 %v180
    %354 = vmatpush1.msra.mxu0 %v179
    %355 = vmatprep.subr.mxu0 %v184
    %356 = vmatpush1.msra.mxu0 %v183
    %357 = vmatprep.subr.mxu0 %v188
    %358 = vmatpush1.msra.mxu0 %v187
    %359 = vmatprep.subr.mxu0 %v192
    %360 = vmatpush1.msra.mxu0 %v191
    %361 = vmatprep.mubr.f32.mxu0 %v202
    %362 = vmatmul.mubr.f32.gmra.mrb[0].mxu0 %v198
    %v363 = vpop.f32.mrb[0].mxu0
    %v364 = vadd.f32 %v217, %v363
    %v365 = vpop.f32.mrb[0].mxu0
    %v366 = vadd.f32 %v221, %v365
    %367 = vdwg.mxu0
    %v368 = vmax.f32 %v293, 0.0
    %v369 = vmax.f32 %v295, 0.0
    %v370 = vmax.f32 %v364, 0.0
    %v371 = vmax.f32 %v366, 0.0
    %v372 = vld [vmem:[#allocation4] sm:$0xff]
    %v373 = vld [vmem:[#allocation4 + $0x8] sm:$0xff]
    %v374 = vld [vmem:[#allocation4 + $0x10] sm:$0xff]
    %v375 = vld [vmem:[#allocation4 + $0x18] sm:$0xff]
    %v376 = vld [vmem:[#allocation4 + $0x20] sm:$0xff]
    %v377 = vld [vmem:[#allocation4 + $0x28] sm:$0xff]
    %v378 = vld [vmem:[#allocation4 + $0x30] sm:$0xff]
    %v379 = vld [vmem:[#allocation4 + $0x38] sm:$0xff]
    %v380 = vld [vmem:[#allocation4 + $0x40] sm:$0xff]
    %v381 = vld [vmem:[#allocation4 + $0x48] sm:$0xff]
    %v382 = vld [vmem:[#allocation4 + $0x50] sm:$0xff]
    %v383 = vld [vmem:[#allocation4 + $0x58] sm:$0xff]
    %v384 = vld [vmem:[#allocation4 + $0x60] sm:$0xff]
    %v385 = vld [vmem:[#allocation4 + $0x68] sm:$0xff]
    %v386 = vld [vmem:[#allocation4 + $0x70] sm:$0xff]
    %v387 = vld [vmem:[#allocation4 + $0x78] sm:$0xff]
    %v388 = vld [vmem:[#allocation4 + $0x80] sm:$0xff]
    %v389 = vld [vmem:[#allocation4 + $0x88] sm:$0xff]
    %v390 = vld [vmem:[#allocation4 + $0x90] sm:$0xff]
    %v391 = vld [vmem:[#allocation4 + $0x98] sm:$0xff]
    %v392 = vld [vmem:[#allocation4 + $0xa0] sm:$0xff]
    %v393 = vld [vmem:[#allocation4 + $0xa8] sm:$0xff]
    %v394 = vld [vmem:[#allocation4 + $0xb0] sm:$0xff]
    %v395 = vld [vmem:[#allocation4 + $0xb8] sm:$0xff]
    %v396 = vld [vmem:[#allocation4 + $0xc0] sm:$0xff]
    %v397 = vld [vmem:[#allocation4 + $0xc8] sm:$0xff]
    %v398 = vld [vmem:[#allocation4 + $0xd0] sm:$0xff]
    %v399 = vld [vmem:[#allocation4 + $0xd8] sm:$0xff]
    %v400 = vld [vmem:[#allocation4 + $0xe0] sm:$0xff]
    %v401 = vld [vmem:[#allocation4 + $0xe8] sm:$0xff]
    %v402 = vld [vmem:[#allocation4 + $0xf0] sm:$0xff]
    %v403 = vld [vmem:[#allocation4 + $0xf8] sm:$0xff]
    %v404 = vld [vmem:[#allocation4 + $0x100] sm:$0xff]
    %v405 = vld [vmem:[#allocation4 + $0x108] sm:$0xff]
    %v406 = vld [vmem:[#allocation4 + $0x110] sm:$0xff]
    %v407 = vld [vmem:[#allocation4 + $0x118] sm:$0xff]
    %v408 = vld [vmem:[#allocation4 + $0x120] sm:$0xff]
    %v409 = vld [vmem:[#allocation4 + $0x128] sm:$0xff]
    %v410 = vld [vmem:[#allocation4 + $0x130] sm:$0xff]
    %v411 = vld [vmem:[#allocation4 + $0x138] sm:$0xff]
    %v412 = vld [vmem:[#allocation4 + $0x140] sm:$0xff]
    %v413 = vld [vmem:[#allocation4 + $0x148] sm:$0xff]
    %v414 = vld [vmem:[#allocation4 + $0x150] sm:$0xff]
    %v415 = vld [vmem:[#allocation4 + $0x158] sm:$0xff]
    %v416 = vld [vmem:[#allocation4 + $0x160] sm:$0xff]
    %v417 = vld [vmem:[#allocation4 + $0x168] sm:$0xff]
    %v418 = vld [vmem:[#allocation4 + $0x170] sm:$0xff]
    %v419 = vld [vmem:[#allocation4 + $0x178] sm:$0xff]
    %v420 = vld [vmem:[#allocation4 + $0x180] sm:$0xff]
    %v421 = vld [vmem:[#allocation4 + $0x188] sm:$0xff]
    %v422 = vld [vmem:[#allocation4 + $0x190] sm:$0xff]
    %v423 = vld [vmem:[#allocation4 + $0x198] sm:$0xff]
    %v424 = vld [vmem:[#allocation4 + $0x1a0] sm:$0xff]
    %v425 = vld [vmem:[#allocation4 + $0x1a8] sm:$0xff]
    %v426 = vld [vmem:[#allocation4 + $0x1b0] sm:$0xff]
    %v427 = vld [vmem:[#allocation4 + $0x1b8] sm:$0xff]
    %v428 = vld [vmem:[#allocation4 + $0x1c0] sm:$0xff]
    %v429 = vld [vmem:[#allocation4 + $0x1c8] sm:$0xff]
    %v430 = vld [vmem:[#allocation4 + $0x1d0] sm:$0xff]
    %v431 = vld [vmem:[#allocation4 + $0x1d8] sm:$0xff]
    %v432 = vld [vmem:[#allocation4 + $0x1e0] sm:$0xff]
    %v433 = vld [vmem:[#allocation4 + $0x1e8] sm:$0xff]
    %v434 = vld [vmem:[#allocation4 + $0x1f0] sm:$0xff]
    %v435 = vld [vmem:[#allocation4 + $0x1f8] sm:$0xff]
    %v436 = vld [vmem:[%s4] sm:$0x1]
    %437 = vmatprep.subr.mxu0 0.0
    %438 = vmatpush1.msra.mxu0 %v372
    %439 = vmatprep.subr.mxu0 0.0
    %440 = vmatpush1.msra.mxu0 %v373
    %441 = vmatprep.subr.mxu0 0.0
    %442 = vmatpush1.msra.mxu0 %v374
    %443 = vmatprep.subr.mxu0 0.0
    %444 = vmatpush1.msra.mxu0 %v375
    %445 = vmatprep.subr.mxu0 0.0
    %446 = vmatpush1.msra.mxu0 %v376
    %447 = vmatprep.subr.mxu0 0.0
    %448 = vmatpush1.msra.mxu0 %v377
    %449 = vmatprep.subr.mxu0 0.0
    %450 = vmatpush1.msra.mxu0 %v378
    %451 = vmatprep.subr.mxu0 0.0
    %452 = vmatpush1.msra.mxu0 %v379
    %453 = vmatprep.subr.mxu0 0.0
    %454 = vmatpush1.msra.mxu0 %v380
    %455 = vmatprep.subr.mxu0 0.0
    %456 = vmatpush1.msra.mxu0 %v381
    %457 = vmatprep.subr.mxu0 0.0
    %458 = vmatpush1.msra.mxu0 %v382
    %459 = vmatprep.subr.mxu0 0.0
    %460 = vmatpush1.msra.mxu0 %v383
    %461 = vmatprep.subr.mxu0 0.0
    %462 = vmatpush1.msra.mxu0 %v384
    %463 = vmatprep.subr.mxu0 0.0
    %464 = vmatpush1.msra.mxu0 %v385
    %465 = vmatprep.subr.mxu0 0.0
    %466 = vmatpush1.msra.mxu0 %v386
    %467 = vmatprep.subr.mxu0 0.0
    %468 = vmatpush1.msra.mxu0 %v387
    %469 = vmatprep.subr.mxu0 0.0
    %470 = vmatpush1.msra.mxu0 %v388
    %471 = vmatprep.subr.mxu0 0.0
    %472 = vmatpush1.msra.mxu0 %v389
    %473 = vmatprep.subr.mxu0 0.0
    %474 = vmatpush1.msra.mxu0 %v390
    %475 = vmatprep.subr.mxu0 0.0
    %476 = vmatpush1.msra.mxu0 %v391
    %477 = vmatprep.subr.mxu0 0.0
    %478 = vmatpush1.msra.mxu0 %v392
    %479 = vmatprep.subr.mxu0 0.0
    %480 = vmatpush1.msra.mxu0 %v393
    %481 = vmatprep.subr.mxu0 0.0
    %482 = vmatpush1.msra.mxu0 %v394
    %483 = vmatprep.subr.mxu0 0.0
    %484 = vmatpush1.msra.mxu0 %v395
    %485 = vmatprep.subr.mxu0 0.0
    %486 = vmatpush1.msra.mxu0 %v396
    %487 = vmatprep.subr.mxu0 0.0
    %488 = vmatpush1.msra.mxu0 %v397
    %489 = vmatprep.subr.mxu0 0.0
    %490 = vmatpush1.msra.mxu0 %v398
    %491 = vmatprep.subr.mxu0 0.0
    %492 = vmatpush1.msra.mxu0 %v399
    %493 = vmatprep.subr.mxu0 0.0
    %494 = vmatpush1.msra.mxu0 %v400
    %495 = vmatprep.subr.mxu0 0.0
    %496 = vmatpush1.msra.mxu0 %v401
    %497 = vmatprep.subr.mxu0 0.0
    %498 = vmatpush1.msra.mxu0 %v402
    %499 = vmatprep.subr.mxu0 0.0
    %500 = vmatpush1.msra.mxu0 %v403
    %501 = vmatprep.mubr.f32.mxu0 %v369
    %502 = vmatmul.mubr.f32.gmra.mrb[0].mxu0 %v368
    %v503 = vpop.f32.mrb[0].mxu0
    %v504 = vadd.f32 %v436, %v503
    %v505 = vpop.f32.mrb[0].mxu0
    %506 = vdwg.mxu0
    %507 = vmatprep.subr.mxu0 0.0
    %508 = vmatpush1.msra.mxu0 %v404
    %509 = vmatprep.subr.mxu0 0.0
    %510 = vmatpush1.msra.mxu0 %v405
    %511 = vmatprep.subr.mxu0 0.0
    %512 = vmatpush1.msra.mxu0 %v406
    %513 = vmatprep.subr.mxu0 0.0
    %514 = vmatpush1.msra.mxu0 %v407
    %515 = vmatprep.subr.mxu0 0.0
    %516 = vmatpush1.msra.mxu0 %v408
    %517 = vmatprep.subr.mxu0 0.0
    %518 = vmatpush1.msra.mxu0 %v409
    %519 = vmatprep.subr.mxu0 0.0
    %520 = vmatpush1.msra.mxu0 %v410
    %521 = vmatprep.subr.mxu0 0.0
    %522 = vmatpush1.msra.mxu0 %v411
    %523 = vmatprep.subr.mxu0 0.0
    %524 = vmatpush1.msra.mxu0 %v412
    %525 = vmatprep.subr.mxu0 0.0
    %526 = vmatpush1.msra.mxu0 %v413
    %527 = vmatprep.subr.mxu0 0.0
    %528 = vmatpush1.msra.mxu0 %v414
    %529 = vmatprep.subr.mxu0 0.0
    %530 = vmatpush1.msra.mxu0 %v415
    %531 = vmatprep.subr.mxu0 0.0
    %532 = vmatpush1.msra.mxu0 %v416
    %533 = vmatprep.subr.mxu0 0.0
    %534 = vmatpush1.msra.mxu0 %v417
    %535 = vmatprep.subr.mxu0 0.0
    %536 = vmatpush1.msra.mxu0 %v418
    %537 = vmatprep.subr.mxu0 0.0
    %538 = vmatpush1.msra.mxu0 %v419
    %539 = vmatprep.subr.mxu0 0.0
    %540 = vmatpush1.msra.mxu0 %v420
    %541 = vmatprep.subr.mxu0 0.0
    %542 = vmatpush1.msra.mxu0 %v421
    %543 = vmatprep.subr.mxu0 0.0
    %544 = vmatpush1.msra.mxu0 %v422
    %545 = vmatprep.subr.mxu0 0.0
    %546 = vmatpush1.msra.mxu0 %v423
    %547 = vmatprep.subr.mxu0 0.0
    %548 = vmatpush1.msra.mxu0 %v424
    %549 = vmatprep.subr.mxu0 0.0
    %550 = vmatpush1.msra.mxu0 %v425
    %551 = vmatprep.subr.mxu0 0.0
    %552 = vmatpush1.msra.mxu0 %v426
    %553 = vmatprep.subr.mxu0 0.0
    %554 = vmatpush1.msra.mxu0 %v427
    %555 = vmatprep.subr.mxu0 0.0
    %556 = vmatpush1.msra.mxu0 %v428
    %557 = vmatprep.subr.mxu0 0.0
    %558 = vmatpush1.msra.mxu0 %v429
    %559 = vmatprep.subr.mxu0 0.0
    %560 = vmatpush1.msra.mxu0 %v430
    %561 = vmatprep.subr.mxu0 0.0
    %562 = vmatpush1.msra.mxu0 %v431
    %563 = vmatprep.subr.mxu0 0.0
    %564 = vmatpush1.msra.mxu0 %v432
    %565 = vmatprep.subr.mxu0 0.0
    %566 = vmatpush1.msra.mxu0 %v433
    %567 = vmatprep.subr.mxu0 0.0
    %568 = vmatpush1.msra.mxu0 %v434
    %569 = vmatprep.subr.mxu0 0.0
    %570 = vmatpush1.msra.mxu0 %v435
    %571 = vmatprep.mubr.f32.mxu0 %v371
    %572 = vmatmul.mubr.f32.gmra.mrb[0].mxu0 %v370
    %v573 = vpop.f32.mrb[0].mxu0
    %v574 = vadd.f32 %v504, %v573
    %v575 = vpop.f32.mrb[0].mxu0
    %576 = vdwg.mxu0
    %vm577 = vcmask 1040384
    %v578 = vsel %vm577, %v574, -inf
    %579 = vmax.xlane.f32.xlu0 %v578
    %v580 = vpop.xlane.xlu0 %579
    %v581 = vsub.f32 %v574, %v580
    %v582 = vmul.f32 %v581, 1.442695
    %v583 = vpow.pop %v582
    %v584 = vld [vmem:[#allocation6] sm:$0xff]
    %v585 = vld [vmem:[#allocation6 + $0x8] sm:$0xff]
    %v586 = vld [vmem:[#allocation6 + $0x10] sm:$0xff]
    %v587 = vld [vmem:[#allocation6 + $0x18] sm:$0xff]
    %v588 = vld [vmem:[#allocation6 + $0x20] sm:$0xff]
    %v589 = vld [vmem:[#allocation6 + $0x28] sm:$0xff]
    %v590 = vld [vmem:[#allocation6 + $0x30] sm:$0xff]
    %v591 = vld [vmem:[#allocation6 + $0x38] sm:$0xff]
    %v592 = vld [vmem:[#allocation6 + $0x40] sm:$0xff]
    %v593 = vld [vmem:[#allocation6 + $0x48] sm:$0xff]
    %v594 = vld [vmem:[#allocation6 + $0x50] sm:$0xff]
    %v595 = vld [vmem:[#allocation6 + $0x58] sm:$0xff]
    %v596 = vld [vmem:[#allocation6 + $0x60] sm:$0xff]
    %v597 = vld [vmem:[#allocation6 + $0x68] sm:$0xff]
    %v598 = vld [vmem:[#allocation6 + $0x70] sm:$0xff]
    %v599 = vld [vmem:[#allocation6 + $0x78] sm:$0xff]
    %600 = vmatprep.subr.mxu0 0.0
    %601 = vmatpush1.msra.mxu0 %v584
    %602 = vmatprep.subr.mxu0 0.0
    %603 = vmatpush1.msra.mxu0 %v585
    %604 = vmatprep.subr.mxu0 0.0
    %605 = vmatpush1.msra.mxu0 %v586
    %606 = vmatprep.subr.mxu0 0.0
    %607 = vmatpush1.msra.mxu0 %v587
    %608 = vmatprep.subr.mxu0 0.0
    %609 = vmatpush1.msra.mxu0 %v588
    %610 = vmatprep.subr.mxu0 0.0
    %611 = vmatpush1.msra.mxu0 %v589
    %612 = vmatprep.subr.mxu0 0.0
    %613 = vmatpush1.msra.mxu0 %v590
    %614 = vmatprep.subr.mxu0 0.0
    %615 = vmatpush1.msra.mxu0 %v591
    %616 = vmatprep.subr.mxu0 0.0
    %617 = vmatpush1.msra.mxu0 %v592
    %618 = vmatprep.subr.mxu0 0.0
    %619 = vmatpush1.msra.mxu0 %v593
    %620 = vmatprep.subr.mxu0 0.0
    %621 = vmatpush1.msra.mxu0 %v594
    %622 = vmatprep.subr.mxu0 0.0
    %623 = vmatpush1.msra.mxu0 %v595
    %624 = vmatprep.subr.mxu0 0.0
    %625 = vmatpush1.msra.mxu0 %v596
    %626 = vmatprep.subr.mxu0 0.0
    %627 = vmatpush1.msra.mxu0 %v597
    %628 = vmatprep.subr.mxu0 0.0
    %629 = vmatpush1.msra.mxu0 %v598
    %630 = vmatprep.subr.mxu0 0.0
    %631 = vmatpush1.msra.mxu0 %v599
    %632 = vmatprep.subr.mxu0 0.0
    %633 = vmatpush1.msra.mxu0 0.0
    %634 = vmatprep.subr.mxu0 0.0
    %635 = vmatpush1.msra.mxu0 0.0
    %636 = vmatprep.subr.mxu0 0.0
    %637 = vmatpush1.msra.mxu0 0.0
    %638 = vmatprep.subr.mxu0 0.0
    %639 = vmatpush1.msra.mxu0 0.0
    %640 = vmatprep.subr.mxu0 0.0
    %641 = vmatpush1.msra.mxu0 0.0
    %642 = vmatprep.subr.mxu0 0.0
    %643 = vmatpush1.msra.mxu0 0.0
    %644 = vmatprep.subr.mxu0 0.0
    %645 = vmatpush1.msra.mxu0 0.0
    %646 = vmatprep.subr.mxu0 0.0
    %647 = vmatpush1.msra.mxu0 0.0
    %648 = vmatprep.subr.mxu0 0.0
    %649 = vmatpush1.msra.mxu0 0.0
    %650 = vmatprep.subr.mxu0 0.0
    %651 = vmatpush1.msra.mxu0 0.0
    %652 = vmatprep.subr.mxu0 0.0
    %653 = vmatpush1.msra.mxu0 0.0
    %654 = vmatprep.subr.mxu0 0.0
    %655 = vmatpush1.msra.mxu0 0.0
    %656 = vmatprep.subr.mxu0 0.0
    %657 = vmatpush1.msra.mxu0 0.0
    %658 = vmatprep.subr.mxu0 0.0
    %659 = vmatpush1.msra.mxu0 0.0
    %660 = vmatprep.subr.mxu0 0.0
    %661 = vmatpush1.msra.mxu0 0.0
    %662 = vmatprep.subr.mxu0 0.0
    %663 = vmatpush1.msra.mxu0 0.0
    %664 = vmatprep.mubr.f32.mxu0 0.0
    %665 = vmatmul.mubr.f32.gmra.mrb[0].mxu0 %v583
    %v666 = vpop.f32.mrb[0].mxu0
    %v667 = vadd.f32 0.0, %v666
    %v668 = vpop.f32.mrb[0].mxu0
    %669 = vdwg.mxu0
    %v670 = vrcp.pop %v667
    %v671 = vmul.f32 %v667, %v670
    %v672 = vsub.f32 2.0, %v671
    %v673 = vmul.f32 %v670, %v672
    %v674 = vmul.f32 %v583, %v673
    %675 = vst [vmem:[%s6] sm:$0x1] %v674
    // Predicated region
    $region38: #{mymodule2_forward.1} parent=1 // pred_check
      _
    $region39: #{mymodule2_forward.1} parent=1 // pred_check_branch
      %677 = sbr.rel (0) target = $region41
    $region40: #{mymodule2_forward.1} parent=1 // pred_region
      _
    $region41: #{mymodule2_forward.1} parent=1 // pred_fallthru
      _
    // Predicated region
    $region42: #{mymodule2_forward.1} parent=1 // pred_check
      _
    $region43: #{mymodule2_forward.1} parent=1 // pred_check_branch
      %679 = sbr.rel (0) target = $region45
    $region44: #{mymodule2_forward.1} parent=1 // pred_region
      _
    $region45: #{mymodule2_forward.1} parent=1 // pred_fallthru
      _
    %680 = vsyncpa [#allocation3], 1
    %681 = vsyncpa [#allocation5], 1

</llo_original>
